<compile_context>
chip_gen: v7x
topology: tpu7x:2x2x1
jax: 0.10.0
libtpu: 0.0.40
codegen_flags: <defaults>
</compile_context>

<pallas_src>
import jax
import jax.numpy as jnp
from jax.experimental import pallas as pl
from jax.experimental.pallas import tpu as pltpu


_BN_EPS = 1e-5
_LRELU_SLOPE = 0.2
_VMEM_LIMIT = 32 * 1024 * 1024          # safe on v7x's 64 MiB physical VMEM
_TM_BUDGET = 24 * 1024 * 1024           # working-set budget used to pick TM
_MAX_TM = 1024


def _round_up(x, m):
    return (x + m - 1) // m * m


# -----------------------------------------------------------------------------
# Pallas kernels
# -----------------------------------------------------------------------------
def _matmul_stats_kernel(p_ref, w_ref, y_ref, ssum_ref, ssq_ref):
    # p_ref: (TM, K) bf16, w_ref: (K, Coutp) bf16 -> f32 accumulate on MXU.
    y = jnp.dot(p_ref[...], w_ref[...], preferred_element_type=jnp.float32)
    # Per-tile channel partial sums for BatchNorm (padded rows are all-zero
    # patches -> contribute exactly zero, so no masking is needed).  Computed
    # in f32 BEFORE the bf16 down-cast so the batch stats stay exact.
    ssum_ref[...] = jnp.sum(y, axis=0).reshape(1, 1, -1)
    ssq_ref[...] = jnp.sum(y * y, axis=0).reshape(1, 1, -1)
    y_ref[...] = y.astype(y_ref.dtype)


def _bn_lrelu_kernel(y_ref, scale_ref, shift_ref, o_ref):
    # Folded BatchNorm: y * (gamma*rsqrt(var+eps)) + (beta - mean*...), then
    # LeakyReLU(0.2).  Output bf16 feeds the next layer's bf16 matmul.
    y = y_ref[...].astype(jnp.float32) * scale_ref[...] + shift_ref[...]
    o_ref[...] = jnp.where(y > 0, y, _LRELU_SLOPE * y).astype(o_ref.dtype)


def _matmul_bias_sigmoid_kernel(p_ref, w_ref, b_ref, o_ref):
    y = jnp.dot(p_ref[...], w_ref[...], preferred_element_type=jnp.float32)
    y = y + b_ref[...]
    o_ref[...] = jax.nn.sigmoid(y)


# -----------------------------------------------------------------------------
# Glue: im2col (cheap slices/stack in plain JAX, no big transpose)
# -----------------------------------------------------------------------------
def _im2col(x_nhwc, kh, kw, stride, pad):
    B, H, W, C = x_nhwc.shape
    xp = jnp.pad(x_nhwc, ((0, 0), (pad, pad), (pad, pad), (0, 0)))
    Ho = (H + 2 * pad - kh) // stride + 1
    Wo = (W + 2 * pad - kw) // stride + 1
    cols = []
    for dy in range(kh):
        for dx in range(kw):
            cols.append(
                xp[:, dy:dy + stride * Ho:stride, dx:dx + stride * Wo:stride, :]
            )  # (B, Ho, Wo, C)
    p = jnp.stack(cols, axis=3)              # (B, Ho, Wo, kh*kw, C)
    p = p.reshape(B * Ho * Wo, kh * kw * C)  # (kh, kw, C)-minor K ordering
    return p, Ho, Wo


def _choose_tm(M, K, coutp):
    """Largest row-tile that keeps the double-buffered working set in VMEM."""
    m8 = _round_up(M, 8)
    weight_bytes = 2 * K * coutp * 2                       # bf16, double-buffered
    per_row = 2 * K * 2 + 2 * coutp * 2 + coutp * 4        # patches + y + f32 temp
    tm = (_TM_BUDGET - weight_bytes) // per_row
    tm = min(tm, _MAX_TM)
    if tm >= m8:
        return m8                                          # single tile == full dims
    return max(16, (tm // 16) * 16)                        # bf16-friendly sublanes


def _pad_rows(a, rows):
    if a.shape[0] == rows:
        return a
    return jnp.pad(a, ((0, rows - a.shape[0]), (0, 0)))


def _weight_to_km(w_oihw, coutp):
    Cout, Cin, kh, kw = w_oihw.shape
    wk = jnp.transpose(w_oihw, (2, 3, 1, 0)).reshape(kh * kw * Cin, Cout)
    if coutp != Cout:
        wk = jnp.pad(wk, ((0, 0), (0, coutp - Cout)))
    return wk.astype(jnp.bfloat16)


_CPARAMS = pltpu.CompilerParams(
    dimension_semantics=("parallel",),
    vmem_limit_bytes=_VMEM_LIMIT,
)


# -----------------------------------------------------------------------------
# Layer wrappers
# -----------------------------------------------------------------------------
def _conv_bn_lrelu(x_nhwc, w_oihw, gamma, beta, stride, pad):
    Cout, Cin, kh, kw = w_oihw.shape
    patches, Ho, Wo = _im2col(x_nhwc, kh, kw, stride, pad)
    M, K = patches.shape
    Coutp = _round_up(Cout, 128)

    wk = _weight_to_km(w_oihw, Coutp)
    if Coutp != Cout:
        gamma = jnp.pad(gamma, (0, Coutp - Cout), constant_values=1.0)
        beta = jnp.pad(beta, (0, Coutp - Cout))

    TM = _choose_tm(M, K, Coutp)
    Mp = _round_up(M, TM)
    nt = Mp // TM
    patches = _pad_rows(patches, Mp).astype(jnp.bfloat16)

    # Pass 1: tiled bf16 matmul (f32 accumulate) + per-tile BN partial sums.
    y, ssum, ssq = pl.pallas_call(
        _matmul_stats_kernel,
        out_shape=(
            jax.ShapeDtypeStruct((Mp, Coutp), jnp.bfloat16),
            jax.ShapeDtypeStruct((nt, 1, Coutp), jnp.float32),
            jax.ShapeDtypeStruct((nt, 1, Coutp), jnp.float32),
        ),
        grid_spec=pltpu.PrefetchScalarGridSpec(
            num_scalar_prefetch=0,
            grid=(nt,),
            in_specs=[
                pl.BlockSpec((TM, K), lambda i: (i, 0)),
                pl.BlockSpec((K, Coutp), lambda i: (0, 0)),
            ],
            out_specs=[
                pl.BlockSpec((TM, Coutp), lambda i: (i, 0)),
                pl.BlockSpec((1, 1, Coutp), lambda i: (i, 0, 0)),
                pl.BlockSpec((1, 1, Coutp), lambda i: (i, 0, 0)),
            ],
        ),
        compiler_params=_CPARAMS,
    )(patches, wk)

    # Exact cross-tile BatchNorm stats (training mode, biased variance).
    total_sum = jnp.sum(ssum, axis=(0, 1))          # (Coutp,)
    total_sq = jnp.sum(ssq, axis=(0, 1))            # (Coutp,)
    mean = total_sum / M
    var = jnp.maximum(total_sq / M - mean * mean, 0.0)
    inv = gamma * jax.lax.rsqrt(var + _BN_EPS)
    scale = inv.reshape(1, Coutp).astype(jnp.float32)
    shift = (beta - mean * inv).reshape(1, Coutp).astype(jnp.float32)

    # Pass 2: tiled normalize + LeakyReLU(0.2), bf16 output for next layer.
    out = pl.pallas_call(
        _bn_lrelu_kernel,
        out_shape=jax.ShapeDtypeStruct((Mp, Coutp), jnp.bfloat16),
        grid_spec=pltpu.PrefetchScalarGridSpec(
            num_scalar_prefetch=0,
            grid=(nt,),
            in_specs=[
                pl.BlockSpec((TM, Coutp), lambda i: (i, 0)),
                pl.BlockSpec((1, Coutp), lambda i: (0, 0)),
                pl.BlockSpec((1, Coutp), lambda i: (0, 0)),
            ],
            out_specs=pl.BlockSpec((TM, Coutp), lambda i: (i, 0)),
        ),
        compiler_params=_CPARAMS,
    )(y, scale, shift)

    B = x_nhwc.shape[0]
    return out[:M, :Cout].reshape(B, Ho, Wo, Cout)


def _conv_sigmoid(x_nhwc, w_oihw, bias, stride, pad):
    Cout, Cin, kh, kw = w_oihw.shape
    patches, Ho, Wo = _im2col(x_nhwc, kh, kw, stride, pad)
    M, K = patches.shape
    Coutp = _round_up(Cout, 128)  # lane-dense: pad Cout=1 -> 128, slice after

    wk = _weight_to_km(w_oihw, Coutp)
    bpad = jnp.pad(bias, (0, Coutp - Cout)).reshape(1, Coutp).astype(jnp.float32)

    TM = _choose_tm(M, K, Coutp)
    Mp = _round_up(M, TM)
    nt = Mp // TM
    patches = _pad_rows(patches, Mp).astype(jnp.bfloat16)

    out = pl.pallas_call(
        _matmul_bias_sigmoid_kernel,
        out_shape=jax.ShapeDtypeStruct((Mp, Coutp), jnp.float32),
        grid_spec=pltpu.PrefetchScalarGridSpec(
            num_scalar_prefetch=0,
            grid=(nt,),
            in_specs=[
                pl.BlockSpec((TM, K), lambda i: (i, 0)),
                pl.BlockSpec((K, Coutp), lambda i: (0, 0)),
                pl.BlockSpec((1, Coutp), lambda i: (0, 0)),
            ],
            out_specs=pl.BlockSpec((TM, Coutp), lambda i: (i, 0)),
        ),
        compiler_params=_CPARAMS,
    )(patches, wk, bpad)

    B = x_nhwc.shape[0]
    return out[:M, :Cout].reshape(B, Ho, Wo, Cout)


# -----------------------------------------------------------------------------
# Discriminator parameters (deterministic, synthetic) and forward
# -----------------------------------------------------------------------------
def init_discriminator_params(key):
    def conv_w(k, cout, cin, kh, kw):
        return 0.05 * jax.random.normal(k, (cout, cin, kh, kw), jnp.float32)

    ks = jax.random.split(key, 4)
    params = {
        # Conv2d(6, 64, 4, 2, 1) + BN(64)
        "w1": conv_w(ks[0], 64, 6, 4, 4), "b1": jnp.zeros((64,), jnp.float32),
        "g1": jnp.ones((64,), jnp.float32), "be1": jnp.zeros((64,), jnp.float32),
        # Conv2d(64, 128, 4, 2, 1) + BN(128)
        "w2": conv_w(ks[1], 128, 64, 4, 4), "b2": jnp.zeros((128,), jnp.float32),
        "g2": jnp.ones((128,), jnp.float32), "be2": jnp.zeros((128,), jnp.float32),
        # Conv2d(128, 256, 4, 2, 1) + BN(256)
        "w3": conv_w(ks[2], 256, 128, 4, 4), "b3": jnp.zeros((256,), jnp.float32),
        "g3": jnp.ones((256,), jnp.float32), "be3": jnp.zeros((256,), jnp.float32),
        # Conv2d(256, 1, 3)  (stride 1, no padding)
        "w4": conv_w(ks[3], 1, 256, 3, 3), "b4": jnp.zeros((1,), jnp.float32),
    }
    # Note: b1/b2/b3 are kept for parameter-list fidelity but are intentionally
    # unused: a per-channel conv bias before training-mode BatchNorm is exactly
    # cancelled by the mean subtraction.
    return params


def discriminator_forward(params, anno_nchw, img_nchw):
    # torch.cat([anno, img], dim=1)  -> channel concat in NCHW
    x = jnp.concatenate([anno_nchw, img_nchw], axis=1)
    # NHWC for the im2col/matmul pipeline; bf16 before im2col so the expanded
    # patch buffer (and all MXU inputs) are half-width in HBM.
    x = jnp.transpose(x, (0, 2, 3, 1)).astype(jnp.bfloat16)

    x = _conv_bn_lrelu(x, params["w1"], params["g1"], params["be1"], 2, 1)
    x = _conv_bn_lrelu(x, params["w2"], params["g2"], params["be2"], 2, 1)
    x = _conv_bn_lrelu(x, params["w3"], params["g3"], params["be3"], 2, 1)
    x = _conv_sigmoid(x, params["w4"], params["b4"], 1, 0)

    # back to NCHW to match the PyTorch output convention
    return jnp.transpose(x, (0, 3, 1, 2))


if __name__ == "__main__":
    key = jax.random.PRNGKey(0)
    k_param, k_anno, k_img = jax.random.split(key, 3)

    params = init_discriminator_params(k_param)

    # Small shapes: batch=2, 3-channel 32x32 images (so the 4-layer net yields
    # a 2x2 patch map: 32 -> 16 -> 8 -> 4 -> 2).
    anno = jax.random.normal(k_anno, (2, 3, 32, 32), jnp.float32)
    img = jax.random.normal(k_img, (2, 3, 32, 32), jnp.float32)

    out = discriminator_forward(params, anno, img)
    out = jax.block_until_ready(out)

    assert out.shape == (2, 1, 2, 2), out.shape
    assert bool(jnp.all(jnp.isfinite(out)))
    assert bool(jnp.all((out >= 0.0) & (out <= 1.0)))
    print("KERNEL_OK")
</pallas_src>

<mosaic_0001>
module attributes {stable_mosaic.version = 11 : i64} {
  func.func @_matmul_stats_kernel(%arg0: i32, %arg1: memref<512x96xbf16, #tpu.memory_space<vmem>>, %arg2: memref<96x128xbf16, #tpu.memory_space<vmem>>, %arg3: memref<512x128xbf16, #tpu.memory_space<vmem>>, %arg4: memref<1x1x128xf32, #tpu.memory_space<vmem>>, %arg5: memref<1x1x128xf32, #tpu.memory_space<vmem>>) attributes {dimension_semantics = [#tpu.dimension_semantics<parallel>], iteration_bounds = array<i64: 1>, scalar_prefetch = 0 : i64, scratch_operands = 0 : i64, tpu.core_type = #tpu.core_type<tc>, window_params = [{transform_indices = @transform_0, window_bounds = array<i64: 512, 96>}, {pipeline_mode = #tpu.pipeline_mode<synchronous>, transform_indices = @transform_1, window_bounds = array<i64: 96, 128>}, {transform_indices = @transform_2, window_bounds = array<i64: 512, 128>}, {transform_indices = @transform_3, window_bounds = array<i64: 1, 1, 128>}, {transform_indices = @transform_4, window_bounds = array<i64: 1, 1, 128>}]} {
    %c0 = arith.constant 0 : index
    %c0_0 = arith.constant 0 : index
    %0 = vector.load %arg1[%c0, %c0_0] : memref<512x96xbf16, #tpu.memory_space<vmem>>, vector<512x96xbf16>
    %c0_1 = arith.constant 0 : index
    %c0_2 = arith.constant 0 : index
    %1 = vector.load %arg2[%c0_1, %c0_2] : memref<96x128xbf16, #tpu.memory_space<vmem>>, vector<96x128xbf16>
    %cst = arith.constant dense<0.000000e+00> : vector<512x128xf32>
    %2 = tpu.matmul %0, %1, %cst {dimension_numbers = #tpu.dot_dimension_numbers<[1], [0], [0], [1], [0, 0, 1, 1], [], []>} : vector<512x96xbf16>, vector<96x128xbf16>, vector<512x128xf32> -> vector<512x128xf32>
    %cst_3 = arith.constant dense<0.000000e+00> : vector<128xf32>
    %3 = vector.multi_reduction <add>, %2, %cst_3 [0] : vector<512x128xf32> to vector<128xf32>
    %4 = vector.shape_cast %3 : vector<128xf32> to vector<1x1x128xf32>
    %c0_4 = arith.constant 0 : index
    %c0_5 = arith.constant 0 : index
    %c0_6 = arith.constant 0 : index
    %5 = vector.load %arg4[%c0_4, %c0_5, %c0_6] : memref<1x1x128xf32, #tpu.memory_space<vmem>>, vector<1x1x128xf32>
    tpu.vector_store %arg4[%c0_4, %c0_5, %c0_6], %4 {strides = array<i32>} : memref<1x1x128xf32, #tpu.memory_space<vmem>>, vector<1x1x128xf32>,
    %6 = arith.mulf %2, %2 : vector<512x128xf32>
    %cst_7 = arith.constant dense<0.000000e+00> : vector<128xf32>
    %7 = vector.multi_reduction <add>, %6, %cst_7 [0] : vector<512x128xf32> to vector<128xf32>
    %8 = vector.shape_cast %7 : vector<128xf32> to vector<1x1x128xf32>
    %c0_8 = arith.constant 0 : index
    %c0_9 = arith.constant 0 : index
    %c0_10 = arith.constant 0 : index
    %9 = vector.load %arg5[%c0_8, %c0_9, %c0_10] : memref<1x1x128xf32, #tpu.memory_space<vmem>>, vector<1x1x128xf32>
    tpu.vector_store %arg5[%c0_8, %c0_9, %c0_10], %8 {strides = array<i32>} : memref<1x1x128xf32, #tpu.memory_space<vmem>>, vector<1x1x128xf32>,
    %10 = arith.truncf %2 : vector<512x128xf32> to vector<512x128xbf16>
    %c0_11 = arith.constant 0 : index
    %c0_12 = arith.constant 0 : index
    %11 = vector.load %arg3[%c0_11, %c0_12] : memref<512x128xbf16, #tpu.memory_space<vmem>>, vector<512x128xbf16>
    tpu.vector_store %arg3[%c0_11, %c0_12], %10 {strides = array<i32>} : memref<512x128xbf16, #tpu.memory_space<vmem>>, vector<512x128xbf16>,
    return
  }
  func.func @transform_0(%arg0: i32) -> (i32, i32) {
    %c0_i32 = arith.constant 0 : i32
    %c0_i32_0 = arith.constant 0 : i32
    return %arg0, %c0_i32 : i32, i32
  }
  func.func @transform_1(%arg0: i32) -> (i32, i32) {
    %c0_i32 = arith.constant 0 : i32
    %c0_i32_0 = arith.constant 0 : i32
    %c0_i32_1 = arith.constant 0 : i32
    return %c0_i32, %c0_i32_0 : i32, i32
  }
  func.func @transform_2(%arg0: i32) -> (i32, i32) {
    %c0_i32 = arith.constant 0 : i32
    %c0_i32_0 = arith.constant 0 : i32
    return %arg0, %c0_i32 : i32, i32
  }
  func.func @transform_3(%arg0: i32) -> (i32, i32, i32) {
    %c0_i32 = arith.constant 0 : i32
    %c0_i32_0 = arith.constant 0 : i32
    %c0_i32_1 = arith.constant 0 : i32
    return %arg0, %c0_i32, %c0_i32_0 : i32, i32, i32
  }
  func.func @transform_4(%arg0: i32) -> (i32, i32, i32) {
    %c0_i32 = arith.constant 0 : i32
    %c0_i32_0 = arith.constant 0 : i32
    %c0_i32_1 = arith.constant 0 : i32
    return %arg0, %c0_i32, %c0_i32_0 : i32, i32, i32
  }
}

</mosaic_0001>

<llo_original>
// kernel: tpu_custom_call.1
$region0: #{tpu_custom_call.1}
  #allocation0 [shape = 'u32[]', space=smem, size = 0x4, offset = 0x4, fixed_abs, tag = 'smem constant byte address 0x4 - core index']
  #allocation1 [shape = 'u32[144,128]{1,0:T(1,128)}', space=vmem, size = 0x12000, scoped, tag = 'internal scratch']
  %s0 = inlined_call_operand.vmem [shape: bf16[512,96], index: 0, kind: input, shape index: {}]
  %s1 = inlined_call_operand.vmem [shape: bf16[96,128], index: 1, kind: input, shape index: {}]
  %s2 = inlined_call_operand.hbm [shape: bf16[512,128], index: 2, kind: output, shape index: {0}]
  %s3 = inlined_call_operand.hbm [shape: f32[1,1,128], index: 3, kind: output, shape index: {1}]
  %s4 = inlined_call_operand.hbm [shape: f32[1,1,128], index: 4, kind: output, shape index: {2}]
  %5 = xla_tuple %s2, %s3, %s4
  %s6 = sld [smem:[#allocation0]]
  $region34: #{tpu_custom_call.1} parent=0
    _
  %s8 = ssub.s32 1, %s6
  %s9 = scalar_select 0, %s8, %s6
  $region1: #{tpu_custom_call.1} parent=0
    #allocation2 [shape = 'u8[131072]{0}', space=vmem, size = 0x20000, scoped, tag = 'output window, operand 0, single buffered']
    #allocation3 [shape = 's32[1]{0}', space=sflag, size = 0x4, scoped, tag = 'scoped memory for tpu_custom_call.1']
    #allocation4 [shape = 'u8[512]{0}', space=vmem, size = 0x400, scoped, tag = 'output window, operand 1, single buffered']
    #allocation5 [shape = 's32[1]{0}', space=sflag, size = 0x4, scoped, tag = 'scoped memory for tpu_custom_call.1']
    #allocation6 [shape = 'u8[512]{0}', space=vmem, size = 0x400, scoped, tag = 'output window, operand 2, single buffered']
    %10 = vsyncpa [#allocation3], 0
    %11 = vsyncpa [#allocation5], 0
    // Predicated region
    $region2: #{tpu_custom_call.1} parent=1 // pred_check
      _
    $region3: #{tpu_custom_call.1} parent=1 // pred_check_branch
      %13 = sbr.rel (0) target = $region5
    $region4: #{tpu_custom_call.1} parent=1 // pred_region
      _
    $region5: #{tpu_custom_call.1} parent=1 // pred_fallthru
      _
    // Predicated region
    $region6: #{tpu_custom_call.1} parent=1 // pred_check
      _
    $region7: #{tpu_custom_call.1} parent=1 // pred_check_branch
      %15 = sbr.rel (0) target = $region9
    $region8: #{tpu_custom_call.1} parent=1 // pred_region
      _
    $region9: #{tpu_custom_call.1} parent=1 // pred_fallthru
      _
    %v17 = vld [vmem:[%s0] sm:$0xf]
    %v18 = vld [vmem:[%s0 + $0x4] sm:$0xf]
    %v19 = vld [vmem:[%s0 + $0x8] sm:$0xf]
    %v20 = vld [vmem:[%s0 + $0xc] sm:$0xf]
    %v21 = vld [vmem:[%s0 + $0x10] sm:$0xf]
    %v22 = vld [vmem:[%s0 + $0x14] sm:$0xf]
    %v23 = vld [vmem:[%s0 + $0x18] sm:$0xf]
    %v24 = vld [vmem:[%s0 + $0x1c] sm:$0xf]
    %v25 = vld [vmem:[%s0 + $0x20] sm:$0xf]
    %v26 = vld [vmem:[%s0 + $0x24] sm:$0xf]
    %v27 = vld [vmem:[%s0 + $0x28] sm:$0xf]
    %v28 = vld [vmem:[%s0 + $0x2c] sm:$0xf]
    %v29 = vld [vmem:[%s0 + $0x30] sm:$0xf]
    %v30 = vld [vmem:[%s0 + $0x34] sm:$0xf]
    %v31 = vld [vmem:[%s0 + $0x38] sm:$0xf]
    %v32 = vld [vmem:[%s0 + $0x3c] sm:$0xf]
    %v33 = vld [vmem:[%s0 + $0x40] sm:$0xf]
    %v34 = vld [vmem:[%s0 + $0x44] sm:$0xf]
    %v35 = vld [vmem:[%s0 + $0x48] sm:$0xf]
    %v36 = vld [vmem:[%s0 + $0x4c] sm:$0xf]
    %v37 = vld [vmem:[%s0 + $0x50] sm:$0xf]
    %v38 = vld [vmem:[%s0 + $0x54] sm:$0xf]
    %v39 = vld [vmem:[%s0 + $0x58] sm:$0xf]
    %v40 = vld [vmem:[%s0 + $0x5c] sm:$0xf]
    %v41 = vld [vmem:[%s0 + $0x60] sm:$0xf]
    %v42 = vld [vmem:[%s0 + $0x64] sm:$0xf]
    %v43 = vld [vmem:[%s0 + $0x68] sm:$0xf]
    %v44 = vld [vmem:[%s0 + $0x6c] sm:$0xf]
    %v45 = vld [vmem:[%s0 + $0x70] sm:$0xf]
    %v46 = vld [vmem:[%s0 + $0x74] sm:$0xf]
    %v47 = vld [vmem:[%s0 + $0x78] sm:$0xf]
    %v48 = vld [vmem:[%s0 + $0x7c] sm:$0xf]
    %v49 = vld [vmem:[%s0 + $0x80] sm:$0xf]
    %v50 = vld [vmem:[%s0 + $0x84] sm:$0xf]
    %v51 = vld [vmem:[%s0 + $0x88] sm:$0xf]
    %v52 = vld [vmem:[%s0 + $0x8c] sm:$0xf]
    %v53 = vld [vmem:[%s0 + $0x90] sm:$0xf]
    %v54 = vld [vmem:[%s0 + $0x94] sm:$0xf]
    %v55 = vld [vmem:[%s0 + $0x98] sm:$0xf]
    %v56 = vld [vmem:[%s0 + $0x9c] sm:$0xf]
    %v57 = vld [vmem:[%s0 + $0xa0] sm:$0xf]
    %v58 = vld [vmem:[%s0 + $0xa4] sm:$0xf]
    %v59 = vld [vmem:[%s0 + $0xa8] sm:$0xf]
    %v60 = vld [vmem:[%s0 + $0xac] sm:$0xf]
    %v61 = vld [vmem:[%s0 + $0xb0] sm:$0xf]
    %v62 = vld [vmem:[%s0 + $0xb4] sm:$0xf]
    %v63 = vld [vmem:[%s0 + $0xb8] sm:$0xf]
    %v64 = vld [vmem:[%s0 + $0xbc] sm:$0xf]
    %v65 = vld [vmem:[%s0 + $0xc0] sm:$0xf]
    %v66 = vld [vmem:[%s0 + $0xc4] sm:$0xf]
    %v67 = vld [vmem:[%s0 + $0xc8] sm:$0xf]
    %v68 = vld [vmem:[%s0 + $0xcc] sm:$0xf]
    %v69 = vld [vmem:[%s0 + $0xd0] sm:$0xf]
    %v70 = vld [vmem:[%s0 + $0xd4] sm:$0xf]
    %v71 = vld [vmem:[%s0 + $0xd8] sm:$0xf]
    %v72 = vld [vmem:[%s0 + $0xdc] sm:$0xf]
    %v73 = vld [vmem:[%s0 + $0xe0] sm:$0xf]
    %v74 = vld [vmem:[%s0 + $0xe4] sm:$0xf]
    %v75 = vld [vmem:[%s0 + $0xe8] sm:$0xf]
    %v76 = vld [vmem:[%s0 + $0xec] sm:$0xf]
    %v77 = vld [vmem:[%s0 + $0xf0] sm:$0xf]
    %v78 = vld [vmem:[%s0 + $0xf4] sm:$0xf]
    %v79 = vld [vmem:[%s0 + $0xf8] sm:$0xf]
    %v80 = vld [vmem:[%s0 + $0xfc] sm:$0xf]
    %v81 = vld [vmem:[%s1] sm:$0xf]
    %v82 = vld [vmem:[%s1 + $0x4] sm:$0xf]
    %v83 = vld [vmem:[%s1 + $0x8] sm:$0xf]
    %v84 = vld [vmem:[%s1 + $0xc] sm:$0xf]
    %v85 = vld [vmem:[%s1 + $0x10] sm:$0xf]
    %v86 = vld [vmem:[%s1 + $0x14] sm:$0xf]
    %v87 = vld [vmem:[%s1 + $0x18] sm:$0xf]
    %v88 = vld [vmem:[%s1 + $0x1c] sm:$0xf]
    %v89 = vld [vmem:[%s1 + $0x20] sm:$0xf]
    %v90 = vld [vmem:[%s1 + $0x24] sm:$0xf]
    %v91 = vld [vmem:[%s1 + $0x28] sm:$0xf]
    %v92 = vld [vmem:[%s1 + $0x2c] sm:$0xf]
    %v157 = vunpack.c.l.b16 %v17
    %v158 = vunpack.c.l.b16 %v18
    %v159 = vunpack.c.l.b16 %v19
    %v160 = vunpack.c.l.b16 %v20
    %v161 = vunpack.c.l.b16 %v21
    %v162 = vunpack.c.l.b16 %v22
    %v163 = vunpack.c.l.b16 %v23
    %v164 = vunpack.c.l.b16 %v24
    %v165 = vunpack.c.l.b16 %v25
    %v166 = vunpack.c.l.b16 %v26
    %v167 = vunpack.c.l.b16 %v27
    %v168 = vunpack.c.l.b16 %v28
    %v169 = vunpack.c.l.b16 %v29
    %v170 = vunpack.c.l.b16 %v30
    %v171 = vunpack.c.l.b16 %v31
    %v172 = vunpack.c.l.b16 %v32
    %v173 = vunpack.c.l.b16 %v33
    %v174 = vunpack.c.l.b16 %v34
    %v175 = vunpack.c.l.b16 %v35
    %v176 = vunpack.c.l.b16 %v36
    %v177 = vunpack.c.l.b16 %v37
    %v178 = vunpack.c.l.b16 %v38
    %v179 = vunpack.c.l.b16 %v39
    %v180 = vunpack.c.l.b16 %v40
    %v181 = vunpack.c.l.b16 %v41
    %v182 = vunpack.c.l.b16 %v42
    %v183 = vunpack.c.l.b16 %v43
    %v184 = vunpack.c.l.b16 %v44
    %v185 = vunpack.c.l.b16 %v45
    %v186 = vunpack.c.l.b16 %v46
    %v187 = vunpack.c.l.b16 %v47
    %v188 = vunpack.c.l.b16 %v48
    %v189 = vunpack.c.l.b16 %v49
    %v190 = vunpack.c.l.b16 %v50
    %v191 = vunpack.c.l.b16 %v51
    %v192 = vunpack.c.l.b16 %v52
    %v193 = vunpack.c.l.b16 %v53
    %v194 = vunpack.c.l.b16 %v54
    %v195 = vunpack.c.l.b16 %v55
    %v196 = vunpack.c.l.b16 %v56
    %v197 = vunpack.c.l.b16 %v57
    %v198 = vunpack.c.l.b16 %v58
    %v199 = vunpack.c.l.b16 %v59
    %v200 = vunpack.c.l.b16 %v60
    %v201 = vunpack.c.l.b16 %v61
    %v202 = vunpack.c.l.b16 %v62
    %v203 = vunpack.c.l.b16 %v63
    %v204 = vunpack.c.l.b16 %v64
    %v205 = vunpack.c.l.b16 %v65
    %v206 = vunpack.c.l.b16 %v66
    %v207 = vunpack.c.l.b16 %v67
    %v208 = vunpack.c.l.b16 %v68
    %v209 = vunpack.c.l.b16 %v69
    %v210 = vunpack.c.l.b16 %v70
    %v211 = vunpack.c.l.b16 %v71
    %v212 = vunpack.c.l.b16 %v72
    %v213 = vunpack.c.l.b16 %v73
    %v214 = vunpack.c.l.b16 %v74
    %v215 = vunpack.c.l.b16 %v75
    %v216 = vunpack.c.l.b16 %v76
    %v217 = vunpack.c.l.b16 %v77
    %v218 = vunpack.c.l.b16 %v78
    %v219 = vunpack.c.l.b16 %v79
    %v220 = vunpack.c.l.b16 %v80
    %v221 = vpack.c.b16 %v158, %v157
    %v222 = vpack.c.b16 %v160, %v159
    %v223 = vpack.c.b16 %v162, %v161
    %v224 = vpack.c.b16 %v164, %v163
    %v225 = vpack.c.b16 %v166, %v165
    %v226 = vpack.c.b16 %v168, %v167
    %v227 = vpack.c.b16 %v170, %v169
    %v228 = vpack.c.b16 %v172, %v171
    %v229 = vpack.c.b16 %v174, %v173
    %v230 = vpack.c.b16 %v176, %v175
    %v231 = vpack.c.b16 %v178, %v177
    %v232 = vpack.c.b16 %v180, %v179
    %v233 = vpack.c.b16 %v182, %v181
    %v234 = vpack.c.b16 %v184, %v183
    %v235 = vpack.c.b16 %v186, %v185
    %v236 = vpack.c.b16 %v188, %v187
    %v237 = vpack.c.b16 %v190, %v189
    %v238 = vpack.c.b16 %v192, %v191
    %v239 = vpack.c.b16 %v194, %v193
    %v240 = vpack.c.b16 %v196, %v195
    %v241 = vpack.c.b16 %v198, %v197
    %v242 = vpack.c.b16 %v200, %v199
    %v243 = vpack.c.b16 %v202, %v201
    %v244 = vpack.c.b16 %v204, %v203
    %v245 = vpack.c.b16 %v206, %v205
    %v246 = vpack.c.b16 %v208, %v207
    %v247 = vpack.c.b16 %v210, %v209
    %v248 = vpack.c.b16 %v212, %v211
    %v249 = vpack.c.b16 %v214, %v213
    %v250 = vpack.c.b16 %v216, %v215
    %v251 = vpack.c.b16 %v218, %v217
    %v252 = vpack.c.b16 %v220, %v219
    %v265 = vunpack.c.l.b16 %v81
    %v266 = vunpack.c.l.b16 %v82
    %v267 = vunpack.c.l.b16 %v83
    %v268 = vunpack.c.l.b16 %v84
    %v269 = vunpack.c.l.b16 %v85
    %v270 = vunpack.c.l.b16 %v86
    %v271 = vunpack.c.l.b16 %v87
    %v272 = vunpack.c.l.b16 %v88
    %v273 = vunpack.c.l.b16 %v89
    %v274 = vunpack.c.l.b16 %v90
    %v275 = vunpack.c.l.b16 %v91
    %v276 = vunpack.c.l.b16 %v92
    %v277 = vpack.c.b16 %v266, %v265
    %v278 = vpack.c.b16 %v268, %v267
    %v279 = vpack.c.b16 %v270, %v269
    %v280 = vpack.c.b16 %v272, %v271
    %v281 = vpack.c.b16 %v274, %v273
    %v282 = vpack.c.b16 %v276, %v275
    %vm289 = vcmask 785408
    %v291 = vsel %vm289, %v221, 0
    %v294 = vsel %vm289, %v222, 0
    %v297 = vsel %vm289, %v223, 0
    %v300 = vsel %vm289, %v224, 0
    %v303 = vsel %vm289, %v225, 0
    %v306 = vsel %vm289, %v226, 0
    %v309 = vsel %vm289, %v227, 0
    %v312 = vsel %vm289, %v228, 0
    %v315 = vsel %vm289, %v229, 0
    %v318 = vsel %vm289, %v230, 0
    %v321 = vsel %vm289, %v231, 0
    %v324 = vsel %vm289, %v232, 0
    %v327 = vsel %vm289, %v233, 0
    %v330 = vsel %vm289, %v234, 0
    %v333 = vsel %vm289, %v235, 0
    %v336 = vsel %vm289, %v236, 0
    %v339 = vsel %vm289, %v237, 0
    %v342 = vsel %vm289, %v238, 0
    %v345 = vsel %vm289, %v239, 0
    %v348 = vsel %vm289, %v240, 0
    %v351 = vsel %vm289, %v241, 0
    %v354 = vsel %vm289, %v242, 0
    %v357 = vsel %vm289, %v243, 0
    %v360 = vsel %vm289, %v244, 0
    %v363 = vsel %vm289, %v245, 0
    %v366 = vsel %vm289, %v246, 0
    %v369 = vsel %vm289, %v247, 0
    %v372 = vsel %vm289, %v248, 0
    %v375 = vsel %vm289, %v249, 0
    %v378 = vsel %vm289, %v250, 0
    %v381 = vsel %vm289, %v251, 0
    %v384 = vsel %vm289, %v252, 0
    %386 = vmatprep.subr.bf16.mxu0 0
    %387 = vmatpush1.bf16.msra.mxu0 %v277
    %388 = vmatprep.subr.bf16.mxu0 0
    %389 = vmatpush1.bf16.msra.mxu0 %v278
    %390 = vmatprep.subr.bf16.mxu0 0
    %391 = vmatpush1.bf16.msra.mxu0 %v279
    %392 = vmatprep.subr.bf16.mxu0 0
    %393 = vmatpush1.bf16.msra.mxu0 %v280
    %394 = vmatprep.subr.bf16.mxu0 0
    %395 = vmatpush1.bf16.msra.mxu0 %v281
    %396 = vmatprep.subr.bf16.mxu0 0
    %397 = vmatpush1.bf16.msra.mxu0 %v282
    %398 = vmatprep.subr.bf16.mxu0 0
    %399 = vmatpush1.bf16.msra.mxu0 0
    %400 = vmatprep.subr.bf16.mxu0 0
    %401 = vmatpush1.bf16.msra.mxu0 0
    %402 = vmatprep.subr.bf16.mxu0 0
    %403 = vmatpush1.bf16.msra.mxu0 0
    %404 = vmatprep.subr.bf16.mxu0 0
    %405 = vmatpush1.bf16.msra.mxu0 0
    %406 = vmatprep.subr.bf16.mxu0 0
    %407 = vmatpush1.bf16.msra.mxu0 0
    %408 = vmatprep.subr.bf16.mxu0 0
    %409 = vmatpush1.bf16.msra.mxu0 0
    %410 = vmatprep.subr.bf16.mxu0 0
    %411 = vmatpush1.bf16.msra.mxu0 0
    %412 = vmatprep.subr.bf16.mxu0 0
    %413 = vmatpush1.bf16.msra.mxu0 0
    %414 = vmatprep.subr.bf16.mxu0 0
    %415 = vmatpush1.bf16.msra.mxu0 0
    %416 = vmatprep.subr.bf16.mxu0 0
    %417 = vmatpush1.bf16.msra.mxu0 0
    %418 = vmatprep.mubr.bf16.mxu0 0
    %419 = vmatmul.mubr.bf16.gmra.mrb[0].mxu0 %v291
    %v420 = vpop.f32.mrb[0].mxu0
    %v421 = vadd.f32 0.0, %v420
    %v422 = vpop.f32.mrb[0].mxu0
    %v423 = vpop.f32.mrb[0].mxu0
    %v424 = vadd.f32 0.0, %v423
    %v425 = vpop.f32.mrb[0].mxu0
    %426 = vmatprep.mubr.bf16.mxu0 0
    %427 = vmatmul.mubr.bf16.gmra.mrb[0].mxu0 %v294
    %v428 = vpop.f32.mrb[0].mxu0
    %v429 = vadd.f32 0.0, %v428
    %v430 = vpop.f32.mrb[0].mxu0
    %v431 = vpop.f32.mrb[0].mxu0
    %v432 = vadd.f32 0.0, %v431
    %v433 = vpop.f32.mrb[0].mxu0
    %434 = vmatprep.mubr.bf16.mxu0 0
    %435 = vmatmul.mubr.bf16.gmra.mrb[0].mxu0 %v297
    %v436 = vpop.f32.mrb[0].mxu0
    %v437 = vadd.f32 0.0, %v436
    %v438 = vpop.f32.mrb[0].mxu0
    %v439 = vpop.f32.mrb[0].mxu0
    %v440 = vadd.f32 0.0, %v439
    %v441 = vpop.f32.mrb[0].mxu0
    %442 = vmatprep.mubr.bf16.mxu0 0
    %443 = vmatmul.mubr.bf16.gmra.mrb[0].mxu0 %v300
    %v444 = vpop.f32.mrb[0].mxu0
    %v445 = vadd.f32 0.0, %v444
    %v446 = vpop.f32.mrb[0].mxu0
    %v447 = vpop.f32.mrb[0].mxu0
    %v448 = vadd.f32 0.0, %v447
    %v449 = vpop.f32.mrb[0].mxu0
    %450 = vmatprep.mubr.bf16.mxu0 0
    %451 = vmatmul.mubr.bf16.gmra.mrb[0].mxu0 %v303
    %v452 = vpop.f32.mrb[0].mxu0
    %v453 = vadd.f32 0.0, %v452
    %v454 = vpop.f32.mrb[0].mxu0
    %v455 = vpop.f32.mrb[0].mxu0
    %v456 = vadd.f32 0.0, %v455
    %v457 = vpop.f32.mrb[0].mxu0
    %458 = vmatprep.mubr.bf16.mxu0 0
    %459 = vmatmul.mubr.bf16.gmra.mrb[0].mxu0 %v306
    %v460 = vpop.f32.mrb[0].mxu0
    %v461 = vadd.f32 0.0, %v460
    %v462 = vpop.f32.mrb[0].mxu0
    %v463 = vpop.f32.mrb[0].mxu0
    %v464 = vadd.f32 0.0, %v463
    %v465 = vpop.f32.mrb[0].mxu0
    %466 = vmatprep.mubr.bf16.mxu0 0
    %467 = vmatmul.mubr.bf16.gmra.mrb[0].mxu0 %v309
    %v468 = vpop.f32.mrb[0].mxu0
    %v469 = vadd.f32 0.0, %v468
    %v470 = vpop.f32.mrb[0].mxu0
    %v471 = vpop.f32.mrb[0].mxu0
    %v472 = vadd.f32 0.0, %v471
    %v473 = vpop.f32.mrb[0].mxu0
    %474 = vmatprep.mubr.bf16.mxu0 0
    %475 = vmatmul.mubr.bf16.gmra.mrb[0].mxu0 %v312
    %v476 = vpop.f32.mrb[0].mxu0
    %v477 = vadd.f32 0.0, %v476
    %v478 = vpop.f32.mrb[0].mxu0
    %v479 = vpop.f32.mrb[0].mxu0
    %v480 = vadd.f32 0.0, %v479
    %v481 = vpop.f32.mrb[0].mxu0
    %482 = vmatprep.mubr.bf16.mxu0 0
    %483 = vmatmul.mubr.bf16.gmra.mrb[0].mxu0 %v315
    %v484 = vpop.f32.mrb[0].mxu0
    %v485 = vadd.f32 0.0, %v484
    %v486 = vpop.f32.mrb[0].mxu0
    %v487 = vpop.f32.mrb[0].mxu0
    %v488 = vadd.f32 0.0, %v487
    %v489 = vpop.f32.mrb[0].mxu0
    %490 = vmatprep.mubr.bf16.mxu0 0
    %491 = vmatmul.mubr.bf16.gmra.mrb[0].mxu0 %v318
    %v492 = vpop.f32.mrb[0].mxu0
    %v493 = vadd.f32 0.0, %v492
    %v494 = vpop.f32.mrb[0].mxu0
    %v495 = vpop.f32.mrb[0].mxu0
    %v496 = vadd.f32 0.0, %v495
    %v497 = vpop.f32.mrb[0].mxu0
    %498 = vmatprep.mubr.bf16.mxu0 0
    %499 = vmatmul.mubr.bf16.gmra.mrb[0].mxu0 %v321
    %v500 = vpop.f32.mrb[0].mxu0
    %v501 = vadd.f32 0.0, %v500
    %v502 = vpop.f32.mrb[0].mxu0
    %v503 = vpop.f32.mrb[0].mxu0
    %v504 = vadd.f32 0.0, %v503
    %v505 = vpop.f32.mrb[0].mxu0
    %506 = vmatprep.mubr.bf16.mxu0 0
    %507 = vmatmul.mubr.bf16.gmra.mrb[0].mxu0 %v324
    %v508 = vpop.f32.mrb[0].mxu0
    %v509 = vadd.f32 0.0, %v508
    %v510 = vpop.f32.mrb[0].mxu0
    %v511 = vpop.f32.mrb[0].mxu0
    %v512 = vadd.f32 0.0, %v511
    %v513 = vpop.f32.mrb[0].mxu0
    %514 = vmatprep.mubr.bf16.mxu0 0
    %515 = vmatmul.mubr.bf16.gmra.mrb[0].mxu0 %v327
    %v516 = vpop.f32.mrb[0].mxu0
    %v517 = vadd.f32 0.0, %v516
    %v518 = vpop.f32.mrb[0].mxu0
    %v519 = vpop.f32.mrb[0].mxu0
    %v520 = vadd.f32 0.0, %v519
    %v521 = vpop.f32.mrb[0].mxu0
    %522 = vmatprep.mubr.bf16.mxu0 0
    %523 = vmatmul.mubr.bf16.gmra.mrb[0].mxu0 %v330
    %v524 = vpop.f32.mrb[0].mxu0
    %v525 = vadd.f32 0.0, %v524
    %v526 = vpop.f32.mrb[0].mxu0
    %v527 = vpop.f32.mrb[0].mxu0
    %v528 = vadd.f32 0.0, %v527
    %v529 = vpop.f32.mrb[0].mxu0
    %530 = vmatprep.mubr.bf16.mxu0 0
    %531 = vmatmul.mubr.bf16.gmra.mrb[0].mxu0 %v333
    %v532 = vpop.f32.mrb[0].mxu0
    %v533 = vadd.f32 0.0, %v532
    %v534 = vpop.f32.mrb[0].mxu0
    %v535 = vpop.f32.mrb[0].mxu0
    %v536 = vadd.f32 0.0, %v535
    %v537 = vpop.f32.mrb[0].mxu0
    %538 = vmatprep.mubr.bf16.mxu0 0
    %539 = vmatmul.mubr.bf16.gmra.mrb[0].mxu0 %v336
    %v540 = vpop.f32.mrb[0].mxu0
    %v541 = vadd.f32 0.0, %v540
    %v542 = vpop.f32.mrb[0].mxu0
    %v543 = vpop.f32.mrb[0].mxu0
    %v544 = vadd.f32 0.0, %v543
    %v545 = vpop.f32.mrb[0].mxu0
    %546 = vmatprep.mubr.bf16.mxu0 0
    %547 = vmatmul.mubr.bf16.gmra.mrb[0].mxu0 %v339
    %v548 = vpop.f32.mrb[0].mxu0
    %v549 = vadd.f32 0.0, %v548
    %v550 = vpop.f32.mrb[0].mxu0
    %v551 = vpop.f32.mrb[0].mxu0
    %v552 = vadd.f32 0.0, %v551
    %v553 = vpop.f32.mrb[0].mxu0
    %554 = vmatprep.mubr.bf16.mxu0 0
    %555 = vmatmul.mubr.bf16.gmra.mrb[0].mxu0 %v342
    %v556 = vpop.f32.mrb[0].mxu0
    %v557 = vadd.f32 0.0, %v556
    %v558 = vpop.f32.mrb[0].mxu0
    %v559 = vpop.f32.mrb[0].mxu0
    %v560 = vadd.f32 0.0, %v559
    %v561 = vpop.f32.mrb[0].mxu0
    %562 = vmatprep.mubr.bf16.mxu0 0
    %563 = vmatmul.mubr.bf16.gmra.mrb[0].mxu0 %v345
    %v564 = vpop.f32.mrb[0].mxu0
    %v565 = vadd.f32 0.0, %v564
    %v566 = vpop.f32.mrb[0].mxu0
    %v567 = vpop.f32.mrb[0].mxu0
    %v568 = vadd.f32 0.0, %v567
    %v569 = vpop.f32.mrb[0].mxu0
    %570 = vmatprep.mubr.bf16.mxu0 0
    %571 = vmatmul.mubr.bf16.gmra.mrb[0].mxu0 %v348
    %v572 = vpop.f32.mrb[0].mxu0
    %v573 = vadd.f32 0.0, %v572
    %v574 = vpop.f32.mrb[0].mxu0
    %v575 = vpop.f32.mrb[0].mxu0
    %v576 = vadd.f32 0.0, %v575
    %v577 = vpop.f32.mrb[0].mxu0
    %578 = vmatprep.mubr.bf16.mxu0 0
    %579 = vmatmul.mubr.bf16.gmra.mrb[0].mxu0 %v351
    %v580 = vpop.f32.mrb[0].mxu0
    %v581 = vadd.f32 0.0, %v580
    %v582 = vpop.f32.mrb[0].mxu0
    %v583 = vpop.f32.mrb[0].mxu0
    %v584 = vadd.f32 0.0, %v583
    %v585 = vpop.f32.mrb[0].mxu0
    %586 = vmatprep.mubr.bf16.mxu0 0
    %587 = vmatmul.mubr.bf16.gmra.mrb[0].mxu0 %v354
    %v588 = vpop.f32.mrb[0].mxu0
    %v589 = vadd.f32 0.0, %v588
    %v590 = vpop.f32.mrb[0].mxu0
    %v591 = vpop.f32.mrb[0].mxu0
    %v592 = vadd.f32 0.0, %v591
    %v593 = vpop.f32.mrb[0].mxu0
    %594 = vmatprep.mubr.bf16.mxu0 0
    %595 = vmatmul.mubr.bf16.gmra.mrb[0].mxu0 %v357
    %v596 = vpop.f32.mrb[0].mxu0
    %v597 = vadd.f32 0.0, %v596
    %v598 = vpop.f32.mrb[0].mxu0
    %v599 = vpop.f32.mrb[0].mxu0
    %v600 = vadd.f32 0.0, %v599
    %v601 = vpop.f32.mrb[0].mxu0
    %602 = vmatprep.mubr.bf16.mxu0 0
    %603 = vmatmul.mubr.bf16.gmra.mrb[0].mxu0 %v360
    %v604 = vpop.f32.mrb[0].mxu0
    %v605 = vadd.f32 0.0, %v604
    %v606 = vpop.f32.mrb[0].mxu0
    %v607 = vpop.f32.mrb[0].mxu0
    %v608 = vadd.f32 0.0, %v607
    %v609 = vpop.f32.mrb[0].mxu0
    %610 = vmatprep.mubr.bf16.mxu0 0
    %611 = vmatmul.mubr.bf16.gmra.mrb[0].mxu0 %v363
    %v612 = vpop.f32.mrb[0].mxu0
    %v613 = vadd.f32 0.0, %v612
    %v614 = vpop.f32.mrb[0].mxu0
    %v615 = vpop.f32.mrb[0].mxu0
    %v616 = vadd.f32 0.0, %v615
    %v617 = vpop.f32.mrb[0].mxu0
    %618 = vmatprep.mubr.bf16.mxu0 0
    %619 = vmatmul.mubr.bf16.gmra.mrb[0].mxu0 %v366
    %v620 = vpop.f32.mrb[0].mxu0
    %v621 = vadd.f32 0.0, %v620
    %v622 = vpop.f32.mrb[0].mxu0
    %v623 = vpop.f32.mrb[0].mxu0
    %v624 = vadd.f32 0.0, %v623
    %v625 = vpop.f32.mrb[0].mxu0
    %626 = vmatprep.mubr.bf16.mxu0 0
    %627 = vmatmul.mubr.bf16.gmra.mrb[0].mxu0 %v369
    %v628 = vpop.f32.mrb[0].mxu0
    %v629 = vadd.f32 0.0, %v628
    %v630 = vpop.f32.mrb[0].mxu0
    %v631 = vpop.f32.mrb[0].mxu0
    %v632 = vadd.f32 0.0, %v631
    %v633 = vpop.f32.mrb[0].mxu0
    %634 = vmatprep.mubr.bf16.mxu0 0
    %635 = vmatmul.mubr.bf16.gmra.mrb[0].mxu0 %v372
    %v636 = vpop.f32.mrb[0].mxu0
    %v637 = vadd.f32 0.0, %v636
    %v638 = vpop.f32.mrb[0].mxu0
    %v639 = vpop.f32.mrb[0].mxu0
    %v640 = vadd.f32 0.0, %v639
    %v641 = vpop.f32.mrb[0].mxu0
    %642 = vmatprep.mubr.bf16.mxu0 0
    %643 = vmatmul.mubr.bf16.gmra.mrb[0].mxu0 %v375
    %v644 = vpop.f32.mrb[0].mxu0
    %v645 = vadd.f32 0.0, %v644
    %v646 = vpop.f32.mrb[0].mxu0
    %v647 = vpop.f32.mrb[0].mxu0
    %v648 = vadd.f32 0.0, %v647
    %v649 = vpop.f32.mrb[0].mxu0
    %650 = vmatprep.mubr.bf16.mxu0 0
    %651 = vmatmul.mubr.bf16.gmra.mrb[0].mxu0 %v378
    %v652 = vpop.f32.mrb[0].mxu0
    %v653 = vadd.f32 0.0, %v652
    %v654 = vpop.f32.mrb[0].mxu0
    %v655 = vpop.f32.mrb[0].mxu0
    %v656 = vadd.f32 0.0, %v655
    %v657 = vpop.f32.mrb[0].mxu0
    %658 = vmatprep.mubr.bf16.mxu0 0
    %659 = vmatmul.mubr.bf16.gmra.mrb[0].mxu0 %v381
    %v660 = vpop.f32.mrb[0].mxu0
    %v661 = vadd.f32 0.0, %v660
    %v662 = vpop.f32.mrb[0].mxu0
    %v663 = vpop.f32.mrb[0].mxu0
    %v664 = vadd.f32 0.0, %v663
    %v665 = vpop.f32.mrb[0].mxu0
    %666 = vmatprep.mubr.bf16.mxu0 0
    %667 = vmatmul.mubr.bf16.gmra.mrb[0].mxu0 %v384
    %v668 = vpop.f32.mrb[0].mxu0
    %v669 = vadd.f32 0.0, %v668
    %v670 = vpop.f32.mrb[0].mxu0
    %v671 = vpop.f32.mrb[0].mxu0
    %v672 = vadd.f32 0.0, %v671
    %v673 = vpop.f32.mrb[0].mxu0
    %674 = vdwg.mxu0
    %v675 = vadd.f32 %v421, %v424
    %v676 = vadd.f32 %v675, %v429
    %v677 = vadd.f32 %v676, %v432
    %v678 = vadd.f32 %v677, %v437
    %v679 = vadd.f32 %v678, %v440
    %v680 = vadd.f32 %v679, %v445
    %v681 = vadd.f32 %v680, %v448
    %v682 = vadd.f32 %v681, %v453
    %v683 = vadd.f32 %v682, %v456
    %v684 = vadd.f32 %v683, %v461
    %v685 = vadd.f32 %v684, %v464
    %v686 = vadd.f32 %v685, %v469
    %v687 = vadd.f32 %v686, %v472
    %v688 = vadd.f32 %v687, %v477
    %v689 = vadd.f32 %v688, %v480
    %v690 = vadd.f32 %v689, %v485
    %v691 = vadd.f32 %v690, %v488
    %v692 = vadd.f32 %v691, %v493
    %v693 = vadd.f32 %v692, %v496
    %v694 = vadd.f32 %v693, %v501
    %v695 = vadd.f32 %v694, %v504
    %v696 = vadd.f32 %v695, %v509
    %v697 = vadd.f32 %v696, %v512
    %v698 = vadd.f32 %v697, %v517
    %v699 = vadd.f32 %v698, %v520
    %v700 = vadd.f32 %v699, %v525
    %v701 = vadd.f32 %v700, %v528
    %v702 = vadd.f32 %v701, %v533
    %v703 = vadd.f32 %v702, %v536
    %v704 = vadd.f32 %v703, %v541
    %v705 = vadd.f32 %v704, %v544
    %v706 = vadd.f32 %v705, %v549
    %v707 = vadd.f32 %v706, %v552
    %v708 = vadd.f32 %v707, %v557
    %v709 = vadd.f32 %v708, %v560
    %v710 = vadd.f32 %v709, %v565
    %v711 = vadd.f32 %v710, %v568
    %v712 = vadd.f32 %v711, %v573
    %v713 = vadd.f32 %v712, %v576
    %v714 = vadd.f32 %v713, %v581
    %v715 = vadd.f32 %v714, %v584
    %v716 = vadd.f32 %v715, %v589
    %v717 = vadd.f32 %v716, %v592
    %v718 = vadd.f32 %v717, %v597
    %v719 = vadd.f32 %v718, %v600
    %v720 = vadd.f32 %v719, %v605
    %v721 = vadd.f32 %v720, %v608
    %v722 = vadd.f32 %v721, %v613
    %v723 = vadd.f32 %v722, %v616
    %v724 = vadd.f32 %v723, %v621
    %v725 = vadd.f32 %v724, %v624
    %v726 = vadd.f32 %v725, %v629
    %v727 = vadd.f32 %v726, %v632
    %v728 = vadd.f32 %v727, %v637
    %v729 = vadd.f32 %v728, %v640
    %v730 = vadd.f32 %v729, %v645
    %v731 = vadd.f32 %v730, %v648
    %v732 = vadd.f32 %v731, %v653
    %v733 = vadd.f32 %v732, %v656
    %v734 = vadd.f32 %v733, %v661
    %v735 = vadd.f32 %v734, %v664
    %v736 = vadd.f32 %v735, %v669
    %v737 = vadd.f32 %v736, %v672
    %v738 = vrot.slane %v737, 4
    %v739 = vadd.f32 %v737, %v738
    %v740 = vrot.slane %v739, 2
    %v741 = vadd.f32 %v739, %v740
    %v742 = vrot.slane %v741, 1
    %v743 = vadd.f32 %v741, %v742
    %744 = vst [vmem:[#allocation4] sm:$0x1] %v743
    %v745 = vmul.f32 %v421, %v421
    %v746 = vmul.f32 %v424, %v424
    %v747 = vmul.f32 %v429, %v429
    %v748 = vmul.f32 %v432, %v432
    %v749 = vmul.f32 %v437, %v437
    %v750 = vmul.f32 %v440, %v440
    %v751 = vmul.f32 %v445, %v445
    %v752 = vmul.f32 %v448, %v448
    %v753 = vmul.f32 %v453, %v453
    %v754 = vmul.f32 %v456, %v456
    %v755 = vmul.f32 %v461, %v461
    %v756 = vmul.f32 %v464, %v464
    %v757 = vmul.f32 %v469, %v469
    %v758 = vmul.f32 %v472, %v472
    %v759 = vmul.f32 %v477, %v477
    %v760 = vmul.f32 %v480, %v480
    %v761 = vmul.f32 %v485, %v485
    %v762 = vmul.f32 %v488, %v488
    %v763 = vmul.f32 %v493, %v493
    %v764 = vmul.f32 %v496, %v496
    %v765 = vmul.f32 %v501, %v501
    %v766 = vmul.f32 %v504, %v504
    %v767 = vmul.f32 %v509, %v509
    %v768 = vmul.f32 %v512, %v512
    %v769 = vmul.f32 %v517, %v517
    %v770 = vmul.f32 %v520, %v520
    %v771 = vmul.f32 %v525, %v525
    %v772 = vmul.f32 %v528, %v528
    %v773 = vmul.f32 %v533, %v533
    %v774 = vmul.f32 %v536, %v536
    %v775 = vmul.f32 %v541, %v541
    %v776 = vmul.f32 %v544, %v544
    %v777 = vmul.f32 %v549, %v549
    %v778 = vmul.f32 %v552, %v552
    %v779 = vmul.f32 %v557, %v557
    %v780 = vmul.f32 %v560, %v560
    %v781 = vmul.f32 %v565, %v565
    %v782 = vmul.f32 %v568, %v568
    %v783 = vmul.f32 %v573, %v573
    %v784 = vmul.f32 %v576, %v576
    %v785 = vmul.f32 %v581, %v581
    %v786 = vmul.f32 %v584, %v584
    %v787 = vmul.f32 %v589, %v589
    %v788 = vmul.f32 %v592, %v592
    %v789 = vmul.f32 %v597, %v597
    %v790 = vmul.f32 %v600, %v600
    %v791 = vmul.f32 %v605, %v605
    %v792 = vmul.f32 %v608, %v608
    %v793 = vmul.f32 %v613, %v613
    %v794 = vmul.f32 %v616, %v616
    %v795 = vmul.f32 %v621, %v621
    %v796 = vmul.f32 %v624, %v624
    %v797 = vmul.f32 %v629, %v629
    %v798 = vmul.f32 %v632, %v632
    %v799 = vmul.f32 %v637, %v637
    %v800 = vmul.f32 %v640, %v640
    %v801 = vmul.f32 %v645, %v645
    %v802 = vmul.f32 %v648, %v648
    %v803 = vmul.f32 %v653, %v653
    %v804 = vmul.f32 %v656, %v656
    %v805 = vmul.f32 %v661, %v661
    %v806 = vmul.f32 %v664, %v664
    %v807 = vmul.f32 %v669, %v669
    %v808 = vmul.f32 %v672, %v672
    %v809 = vadd.f32 %v745, %v746
    %v810 = vadd.f32 %v809, %v747
    %v811 = vadd.f32 %v810, %v748
    %v812 = vadd.f32 %v811, %v749
    %v813 = vadd.f32 %v812, %v750
    %v814 = vadd.f32 %v813, %v751
    %v815 = vadd.f32 %v814, %v752
    %v816 = vadd.f32 %v815, %v753
    %v817 = vadd.f32 %v816, %v754
    %v818 = vadd.f32 %v817, %v755
    %v819 = vadd.f32 %v818, %v756
    %v820 = vadd.f32 %v819, %v757
    %v821 = vadd.f32 %v820, %v758
    %v822 = vadd.f32 %v821, %v759
    %v823 = vadd.f32 %v822, %v760
    %v824 = vadd.f32 %v823, %v761
    %v825 = vadd.f32 %v824, %v762
    %v826 = vadd.f32 %v825, %v763
    %v827 = vadd.f32 %v826, %v764
    %v828 = vadd.f32 %v827, %v765
    %v829 = vadd.f32 %v828, %v766
    %v830 = vadd.f32 %v829, %v767
    %v831 = vadd.f32 %v830, %v768
    %v832 = vadd.f32 %v831, %v769
    %v833 = vadd.f32 %v832, %v770
    %v834 = vadd.f32 %v833, %v771
    %v835 = vadd.f32 %v834, %v772
    %v836 = vadd.f32 %v835, %v773
    %v837 = vadd.f32 %v836, %v774
    %v838 = vadd.f32 %v837, %v775
    %v839 = vadd.f32 %v838, %v776
    %v840 = vadd.f32 %v839, %v777
    %v841 = vadd.f32 %v840, %v778
    %v842 = vadd.f32 %v841, %v779
    %v843 = vadd.f32 %v842, %v780
    %v844 = vadd.f32 %v843, %v781
    %v845 = vadd.f32 %v844, %v782
    %v846 = vadd.f32 %v845, %v783
    %v847 = vadd.f32 %v846, %v784
    %v848 = vadd.f32 %v847, %v785
    %v849 = vadd.f32 %v848, %v786
    %v850 = vadd.f32 %v849, %v787
    %v851 = vadd.f32 %v850, %v788
    %v852 = vadd.f32 %v851, %v789
    %v853 = vadd.f32 %v852, %v790
    %v854 = vadd.f32 %v853, %v791
    %v855 = vadd.f32 %v854, %v792
    %v856 = vadd.f32 %v855, %v793
    %v857 = vadd.f32 %v856, %v794
    %v858 = vadd.f32 %v857, %v795
    %v859 = vadd.f32 %v858, %v796
    %v860 = vadd.f32 %v859, %v797
    %v861 = vadd.f32 %v860, %v798
    %v862 = vadd.f32 %v861, %v799
    %v863 = vadd.f32 %v862, %v800
    %v864 = vadd.f32 %v863, %v801
    %v865 = vadd.f32 %v864, %v802
    %v866 = vadd.f32 %v865, %v803
    %v867 = vadd.f32 %v866, %v804
    %v868 = vadd.f32 %v867, %v805
    %v869 = vadd.f32 %v868, %v806
    %v870 = vadd.f32 %v869, %v807
    %v871 = vadd.f32 %v870, %v808
    %v872 = vrot.slane %v871, 4
    %v873 = vadd.f32 %v871, %v872
    %v874 = vrot.slane %v873, 2
    %v875 = vadd.f32 %v873, %v874
    %v876 = vrot.slane %v875, 1
    %v877 = vadd.f32 %v875, %v876
    %878 = vst [vmem:[#allocation6] sm:$0x1] %v877
    %v879 = vpack.c.bf16 %v424, %v421
    %v880 = vpack.c.bf16 %v432, %v429
    %v881 = vpack.c.bf16 %v440, %v437
    %v882 = vpack.c.bf16 %v448, %v445
    %v883 = vpack.c.bf16 %v456, %v453
    %v884 = vpack.c.bf16 %v464, %v461
    %v885 = vpack.c.bf16 %v472, %v469
    %v886 = vpack.c.bf16 %v480, %v477
    %v887 = vpack.c.bf16 %v488, %v485
    %v888 = vpack.c.bf16 %v496, %v493
    %v889 = vpack.c.bf16 %v504, %v501
    %v890 = vpack.c.bf16 %v512, %v509
    %v891 = vpack.c.bf16 %v520, %v517
    %v892 = vpack.c.bf16 %v528, %v525
    %v893 = vpack.c.bf16 %v536, %v533
    %v894 = vpack.c.bf16 %v544, %v541
    %v895 = vpack.c.bf16 %v552, %v549
    %v896 = vpack.c.bf16 %v560, %v557
    %v897 = vpack.c.bf16 %v568, %v565
    %v898 = vpack.c.bf16 %v576, %v573
    %v899 = vpack.c.bf16 %v584, %v581
    %v900 = vpack.c.bf16 %v592, %v589
    %v901 = vpack.c.bf16 %v600, %v597
    %v902 = vpack.c.bf16 %v608, %v605
    %v903 = vpack.c.bf16 %v616, %v613
    %v904 = vpack.c.bf16 %v624, %v621
    %v905 = vpack.c.bf16 %v632, %v629
    %v906 = vpack.c.bf16 %v640, %v637
    %v907 = vpack.c.bf16 %v648, %v645
    %v908 = vpack.c.bf16 %v656, %v653
    %v909 = vpack.c.bf16 %v664, %v661
    %v910 = vpack.c.bf16 %v672, %v669
    %v943 = vunpack.c.l.b16 %v879
    %v944 = vunpack.c.h.b16 %v879
    %v945 = vunpack.c.l.b16 %v880
    %v946 = vunpack.c.h.b16 %v880
    %v947 = vunpack.c.l.b16 %v881
    %v948 = vunpack.c.h.b16 %v881
    %v949 = vunpack.c.l.b16 %v882
    %v950 = vunpack.c.h.b16 %v882
    %v951 = vunpack.c.l.b16 %v883
    %v952 = vunpack.c.h.b16 %v883
    %v953 = vunpack.c.l.b16 %v884
    %v954 = vunpack.c.h.b16 %v884
    %v955 = vunpack.c.l.b16 %v885
    %v956 = vunpack.c.h.b16 %v885
    %v957 = vunpack.c.l.b16 %v886
    %v958 = vunpack.c.h.b16 %v886
    %v959 = vunpack.c.l.b16 %v887
    %v960 = vunpack.c.h.b16 %v887
    %v961 = vunpack.c.l.b16 %v888
    %v962 = vunpack.c.h.b16 %v888
    %v963 = vunpack.c.l.b16 %v889
    %v964 = vunpack.c.h.b16 %v889
    %v965 = vunpack.c.l.b16 %v890
    %v966 = vunpack.c.h.b16 %v890
    %v967 = vunpack.c.l.b16 %v891
    %v968 = vunpack.c.h.b16 %v891
    %v969 = vunpack.c.l.b16 %v892
    %v970 = vunpack.c.h.b16 %v892
    %v971 = vunpack.c.l.b16 %v893
    %v972 = vunpack.c.h.b16 %v893
    %v973 = vunpack.c.l.b16 %v894
    %v974 = vunpack.c.h.b16 %v894
    %v975 = vunpack.c.l.b16 %v895
    %v976 = vunpack.c.h.b16 %v895
    %v977 = vunpack.c.l.b16 %v896
    %v978 = vunpack.c.h.b16 %v896
    %v979 = vunpack.c.l.b16 %v897
    %v980 = vunpack.c.h.b16 %v897
    %v981 = vunpack.c.l.b16 %v898
    %v982 = vunpack.c.h.b16 %v898
    %v983 = vunpack.c.l.b16 %v899
    %v984 = vunpack.c.h.b16 %v899
    %v985 = vunpack.c.l.b16 %v900
    %v986 = vunpack.c.h.b16 %v900
    %v987 = vunpack.c.l.b16 %v901
    %v988 = vunpack.c.h.b16 %v901
    %v989 = vunpack.c.l.b16 %v902
    %v990 = vunpack.c.h.b16 %v902
    %v991 = vunpack.c.l.b16 %v903
    %v992 = vunpack.c.h.b16 %v903
    %v993 = vunpack.c.l.b16 %v904
    %v994 = vunpack.c.h.b16 %v904
    %v995 = vunpack.c.l.b16 %v905
    %v996 = vunpack.c.h.b16 %v905
    %v997 = vunpack.c.l.b16 %v906
    %v998 = vunpack.c.h.b16 %v906
    %v999 = vunpack.c.l.b16 %v907
    %v1000 = vunpack.c.h.b16 %v907
    %v1001 = vunpack.c.l.b16 %v908
    %v1002 = vunpack.c.h.b16 %v908
    %v1003 = vunpack.c.l.b16 %v909
    %v1004 = vunpack.c.h.b16 %v909
    %v1005 = vunpack.c.l.b16 %v910
    %v1006 = vunpack.c.h.b16 %v910
    %v1007 = vpack.c.b16 %v943, %v943
    %v1008 = vpack.c.b16 %v944, %v944
    %v1009 = vpack.c.b16 %v945, %v945
    %v1010 = vpack.c.b16 %v946, %v946
    %v1011 = vpack.c.b16 %v947, %v947
    %v1012 = vpack.c.b16 %v948, %v948
    %v1013 = vpack.c.b16 %v949, %v949
    %v1014 = vpack.c.b16 %v950, %v950
    %v1015 = vpack.c.b16 %v951, %v951
    %v1016 = vpack.c.b16 %v952, %v952
    %v1017 = vpack.c.b16 %v953, %v953
    %v1018 = vpack.c.b16 %v954, %v954
    %v1019 = vpack.c.b16 %v955, %v955
    %v1020 = vpack.c.b16 %v956, %v956
    %v1021 = vpack.c.b16 %v957, %v957
    %v1022 = vpack.c.b16 %v958, %v958
    %v1023 = vpack.c.b16 %v959, %v959
    %v1024 = vpack.c.b16 %v960, %v960
    %v1025 = vpack.c.b16 %v961, %v961
    %v1026 = vpack.c.b16 %v962, %v962
    %v1027 = vpack.c.b16 %v963, %v963
    %v1028 = vpack.c.b16 %v964, %v964
    %v1029 = vpack.c.b16 %v965, %v965
    %v1030 = vpack.c.b16 %v966, %v966
    %v1031 = vpack.c.b16 %v967, %v967
    %v1032 = vpack.c.b16 %v968, %v968
    %v1033 = vpack.c.b16 %v969, %v969
    %v1034 = vpack.c.b16 %v970, %v970
    %v1035 = vpack.c.b16 %v971, %v971
    %v1036 = vpack.c.b16 %v972, %v972
    %v1037 = vpack.c.b16 %v973, %v973
    %v1038 = vpack.c.b16 %v974, %v974
    %v1039 = vpack.c.b16 %v975, %v975
    %v1040 = vpack.c.b16 %v976, %v976
    %v1041 = vpack.c.b16 %v977, %v977
    %v1042 = vpack.c.b16 %v978, %v978
    %v1043 = vpack.c.b16 %v979, %v979
    %v1044 = vpack.c.b16 %v980, %v980
    %v1045 = vpack.c.b16 %v981, %v981
    %v1046 = vpack.c.b16 %v982, %v982
    %v1047 = vpack.c.b16 %v983, %v983
    %v1048 = vpack.c.b16 %v984, %v984
    %v1049 = vpack.c.b16 %v985, %v985
    %v1050 = vpack.c.b16 %v986, %v986
    %v1051 = vpack.c.b16 %v987, %v987
    %v1052 = vpack.c.b16 %v988, %v988
    %v1053 = vpack.c.b16 %v989, %v989
    %v1054 = vpack.c.b16 %v990, %v990
    %v1055 = vpack.c.b16 %v991, %v991
    %v1056 = vpack.c.b16 %v992, %v992
    %v1057 = vpack.c.b16 %v993, %v993
    %v1058 = vpack.c.b16 %v994, %v994
    %v1059 = vpack.c.b16 %v995, %v995
    %v1060 = vpack.c.b16 %v996, %v996
    %v1061 = vpack.c.b16 %v997, %v997
    %v1062 = vpack.c.b16 %v998, %v998
    %v1063 = vpack.c.b16 %v999, %v999
    %v1064 = vpack.c.b16 %v1000, %v1000
    %v1065 = vpack.c.b16 %v1001, %v1001
    %v1066 = vpack.c.b16 %v1002, %v1002
    %v1067 = vpack.c.b16 %v1003, %v1003
    %v1068 = vpack.c.b16 %v1004, %v1004
    %v1069 = vpack.c.b16 %v1005, %v1005
    %v1070 = vpack.c.b16 %v1006, %v1006
    %1135 = vst [vmem:[#allocation2] sm:$0xf] %v1007
    %1136 = vst [vmem:[#allocation2 + $0x4] sm:$0xf] %v1008
    %1137 = vst [vmem:[#allocation2 + $0x8] sm:$0xf] %v1009
    %1138 = vst [vmem:[#allocation2 + $0xc] sm:$0xf] %v1010
    %1139 = vst [vmem:[#allocation2 + $0x10] sm:$0xf] %v1011
    %1140 = vst [vmem:[#allocation2 + $0x14] sm:$0xf] %v1012
    %1141 = vst [vmem:[#allocation2 + $0x18] sm:$0xf] %v1013
    %1142 = vst [vmem:[#allocation2 + $0x1c] sm:$0xf] %v1014
    %1143 = vst [vmem:[#allocation2 + $0x20] sm:$0xf] %v1015
    %1144 = vst [vmem:[#allocation2 + $0x24] sm:$0xf] %v1016
    %1145 = vst [vmem:[#allocation2 + $0x28] sm:$0xf] %v1017
    %1146 = vst [vmem:[#allocation2 + $0x2c] sm:$0xf] %v1018
    %1147 = vst [vmem:[#allocation2 + $0x30] sm:$0xf] %v1019
    %1148 = vst [vmem:[#allocation2 + $0x34] sm:$0xf] %v1020
    %1149 = vst [vmem:[#allocation2 + $0x38] sm:$0xf] %v1021
    %1150 = vst [vmem:[#allocation2 + $0x3c] sm:$0xf] %v1022
    %1151 = vst [vmem:[#allocation2 + $0x40] sm:$0xf] %v1023
    %1152 = vst [vmem:[#allocation2 + $0x44] sm:$0xf] %v1024
    %1153 = vst [vmem:[#allocation2 + $0x48] sm:$0xf] %v1025
    %1154 = vst [vmem:[#allocation2 + $0x4c] sm:$0xf] %v1026
    %1155 = vst [vmem:[#allocation2 + $0x50] sm:$0xf] %v1027
    %1156 = vst [vmem:[#allocation2 + $0x54] sm:$0xf] %v1028
    %1157 = vst [vmem:[#allocation2 + $0x58] sm:$0xf] %v1029
    %1158 = vst [vmem:[#allocation2 + $0x5c] sm:$0xf] %v1030
    %1159 = vst [vmem:[#allocation2 + $0x60] sm:$0xf] %v1031
    %1160 = vst [vmem:[#allocation2 + $0x64] sm:$0xf] %v1032
    %1161 = vst [vmem:[#allocation2 + $0x68] sm:$0xf] %v1033
    %1162 = vst [vmem:[#allocation2 + $0x6c] sm:$0xf] %v1034
    %1163 = vst [vmem:[#allocation2 + $0x70] sm:$0xf] %v1035
    %1164 = vst [vmem:[#allocation2 + $0x74] sm:$0xf] %v1036
    %1165 = vst [vmem:[#allocation2 + $0x78] sm:$0xf] %v1037
    %1166 = vst [vmem:[#allocation2 + $0x7c] sm:$0xf] %v1038
    %1167 = vst [vmem:[#allocation2 + $0x80] sm:$0xf] %v1039
    %1168 = vst [vmem:[#allocation2 + $0x84] sm:$0xf] %v1040
    %1169 = vst [vmem:[#allocation2 + $0x88] sm:$0xf] %v1041
    %1170 = vst [vmem:[#allocation2 + $0x8c] sm:$0xf] %v1042
    %1171 = vst [vmem:[#allocation2 + $0x90] sm:$0xf] %v1043
    %1172 = vst [vmem:[#allocation2 + $0x94] sm:$0xf] %v1044
    %1173 = vst [vmem:[#allocation2 + $0x98] sm:$0xf] %v1045
    %1174 = vst [vmem:[#allocation2 + $0x9c] sm:$0xf] %v1046
    %1175 = vst [vmem:[#allocation2 + $0xa0] sm:$0xf] %v1047
    %1176 = vst [vmem:[#allocation2 + $0xa4] sm:$0xf] %v1048
    %1177 = vst [vmem:[#allocation2 + $0xa8] sm:$0xf] %v1049
    %1178 = vst [vmem:[#allocation2 + $0xac] sm:$0xf] %v1050
    %1179 = vst [vmem:[#allocation2 + $0xb0] sm:$0xf] %v1051
    %1180 = vst [vmem:[#allocation2 + $0xb4] sm:$0xf] %v1052
    %1181 = vst [vmem:[#allocation2 + $0xb8] sm:$0xf] %v1053
    %1182 = vst [vmem:[#allocation2 + $0xbc] sm:$0xf] %v1054
    %1183 = vst [vmem:[#allocation2 + $0xc0] sm:$0xf] %v1055
    %1184 = vst [vmem:[#allocation2 + $0xc4] sm:$0xf] %v1056
    %1185 = vst [vmem:[#allocation2 + $0xc8] sm:$0xf] %v1057
    %1186 = vst [vmem:[#allocation2 + $0xcc] sm:$0xf] %v1058
    %1187 = vst [vmem:[#allocation2 + $0xd0] sm:$0xf] %v1059
    %1188 = vst [vmem:[#allocation2 + $0xd4] sm:$0xf] %v1060
    %1189 = vst [vmem:[#allocation2 + $0xd8] sm:$0xf] %v1061
    %1190 = vst [vmem:[#allocation2 + $0xdc] sm:$0xf] %v1062
    %1191 = vst [vmem:[#allocation2 + $0xe0] sm:$0xf] %v1063
    %1192 = vst [vmem:[#allocation2 + $0xe4] sm:$0xf] %v1064
    %1193 = vst [vmem:[#allocation2 + $0xe8] sm:$0xf] %v1065
    %1194 = vst [vmem:[#allocation2 + $0xec] sm:$0xf] %v1066
    %1195 = vst [vmem:[#allocation2 + $0xf0] sm:$0xf] %v1067
    %1196 = vst [vmem:[#allocation2 + $0xf4] sm:$0xf] %v1068
    %1197 = vst [vmem:[#allocation2 + $0xf8] sm:$0xf] %v1069
    %1198 = vst [vmem:[#allocation2 + $0xfc] sm:$0xf] %v1070
    // Predicated region
    $region10: #{tpu_custom_call.1} parent=1 // pred_check
      _
    $region11: #{tpu_custom_call.1} parent=1 // pred_check_branch
      %1200 = sbr.rel (0) target = $region13
    $region12: #{tpu_custom_call.1} parent=1 // pred_region
      %s1202 = ssub.s32 4096, 4096
      %1203 = vsyncadd [#allocation3], %s1202
      %s1204 = sshll.u32 [#allocation2], 4
      %s1205 = int_to_ptr.vmem [resolvable:$true] %s1204
      %1210 = dma.vmem_to_hbm [thread:$0]  %s1205, 4096, %s2, [#allocation3], 64, 64, 4
    $region13: #{tpu_custom_call.1} parent=1 // pred_fallthru
      _
    // Predicated region
    $region14: #{tpu_custom_call.1} parent=1 // pred_check
      _
    $region15: #{tpu_custom_call.1} parent=1 // pred_check_branch
      %1212 = sbr.rel (0) target = $region17
    $region16: #{tpu_custom_call.1} parent=1 // pred_region
      %s1214 = ssub.s32 16, 16
      %1215 = vsyncadd [#allocation5], %s1214
      %s1217 = sshll.u32 [#allocation4], 4
      %s1218 = int_to_ptr.vmem [resolvable:$true] %s1217
      %1220 = dma.vmem_to_hbm [thread:$0]  %s1218, 16, %s3, [#allocation5]
    $region17: #{tpu_custom_call.1} parent=1 // pred_fallthru
      _
    // Predicated region
    $region18: #{tpu_custom_call.1} parent=1 // pred_check
      _
    $region19: #{tpu_custom_call.1} parent=1 // pred_check_branch
      %1222 = sbr.rel (0) target = $region21
    $region20: #{tpu_custom_call.1} parent=1 // pred_region
      %s1224 = ssub.s32 16, 16
      %1225 = vsyncadd [#allocation5], %s1224
      %s1227 = sshll.u32 [#allocation6], 4
      %s1228 = int_to_ptr.vmem [resolvable:$true] %s1227
      %1230 = dma.vmem_to_hbm [thread:$0]  %s1228, 16, %s4, [#allocation5]
    $region21: #{tpu_custom_call.1} parent=1 // pred_fallthru
      _
    // Predicated region
    $region22: #{tpu_custom_call.1} parent=1 // pred_check
      _
    $region23: #{tpu_custom_call.1} parent=1 // pred_check_branch
      %1232 = sbr.rel (0) target = $region25
    $region24: #{tpu_custom_call.1} parent=1 // pred_region
      %1233 = dma.done [#allocation3], 4096
    $region25: #{tpu_custom_call.1} parent=1 // pred_fallthru
      _
    // Predicated region
    $region26: #{tpu_custom_call.1} parent=1 // pred_check
      _
    $region27: #{tpu_custom_call.1} parent=1 // pred_check_branch
      %1235 = sbr.rel (0) target = $region29
    $region28: #{tpu_custom_call.1} parent=1 // pred_region
      %1236 = dma.done [#allocation5], 16
    $region29: #{tpu_custom_call.1} parent=1 // pred_fallthru
      _
    // Predicated region
    $region30: #{tpu_custom_call.1} parent=1 // pred_check
      _
    $region31: #{tpu_custom_call.1} parent=1 // pred_check_branch
      %1238 = sbr.rel (0) target = $region33
    $region32: #{tpu_custom_call.1} parent=1 // pred_region
      %1239 = dma.done [#allocation5], 16
    $region33: #{tpu_custom_call.1} parent=1 // pred_fallthru
      _
    %1240 = vsyncpa [#allocation3], 1
    %1241 = vsyncpa [#allocation5], 1

</llo_original>
